<compile_context>
chip_gen: v6e
topology: v6e:2x2x1
jax: 0.10.0
libtpu: 0.0.40
codegen_flags: <defaults>
</compile_context>

<pallas_src>
import functools

import jax
import jax.numpy as jnp
from jax.experimental import pallas as pl
from jax.experimental.pallas import tpu as pltpu

EPS = 1e-5


# ---------------------------------------------------------------------------
# Fused kernel: grid = (2, num_tiles).
#   phase 0: conv (single MXU matmul) -> VMEM conv slab + per-channel stats.
#   phase 1: fold stats+affine once, normalize + ReLU each tile from VMEM.
# ---------------------------------------------------------------------------
def fused_conv_bn_relu_kernel(
    w_ref, p_ref, gamma_ref, beta_ref, o_ref,
    conv_buf, sum_ref, ssq_ref, scale_ref, shift_ref, *, inv_m, tm):
    # w_ref:     (Cout, K)     folded 3x3 weights, K = 9*Cin
    # p_ref:     (K, tm)       im2col patch tile (lane axis = flattened N*H*W)
    # gamma/beta:(Cout, 1)
    # o_ref:     (Cout, tm)    final output tile (lane-dense)
    # conv_buf:  (Cout, M)     VMEM-resident f32 conv slab
    # sum/ssq/scale/shift: (Cout, 1) VMEM scratch
    phase = pl.program_id(0)
    i = pl.program_id(1)
    off = i * tm
    if tm % 128 == 0:
        off = pl.multiple_of(off, 128)

    @pl.when(jnp.logical_and(phase == 0, i == 0))
    def _init():
        sum_ref[...] = jnp.zeros_like(sum_ref)
        ssq_ref[...] = jnp.zeros_like(ssq_ref)

    @pl.when(phase == 0)
    def _conv_and_stats():
        y = jnp.dot(w_ref[...], p_ref[...], preferred_element_type=jnp.float32)
        conv_buf[:, pl.ds(off, tm)] = y
        sum_ref[...] += jnp.sum(y, axis=-1, keepdims=True)
        ssq_ref[...] += jnp.sum(y * y, axis=-1, keepdims=True)

    @pl.when(jnp.logical_and(phase == 1, i == 0))
    def _finalize_stats():
        mean = sum_ref[...] * inv_m
        var = ssq_ref[...] * inv_m - mean * mean        # biased (training) variance
        scale = gamma_ref[...] * jax.lax.rsqrt(var + EPS)
        scale_ref[...] = scale
        shift_ref[...] = beta_ref[...] - mean * scale

    @pl.when(phase == 1)
    def _bn_relu():
        y = conv_buf[:, pl.ds(off, tm)] * scale_ref[...] + shift_ref[...]
        o_ref[...] = jnp.maximum(y, 0.0).astype(o_ref.dtype)


# ---------------------------------------------------------------------------
# Fallback (verified) two-call pipeline for activations whose f32 conv slab
# does not fit in VMEM.
# ---------------------------------------------------------------------------
def conv_stats_kernel(w_ref, p_ref, conv_ref, sum_ref, ssq_ref):
    @pl.when(pl.program_id(0) == 0)
    def _init():
        sum_ref[...] = jnp.zeros_like(sum_ref)
        ssq_ref[...] = jnp.zeros_like(ssq_ref)

    y = jnp.dot(w_ref[...], p_ref[...], preferred_element_type=jnp.float32)
    conv_ref[...] = y
    sum_ref[...] += jnp.sum(y, axis=-1, keepdims=True)
    ssq_ref[...] += jnp.sum(y * y, axis=-1, keepdims=True)


def bn_relu_kernel(conv_ref, sum_ref, ssq_ref, gamma_ref, beta_ref, o_ref, *, inv_m):
    mean = sum_ref[...] * inv_m
    var = ssq_ref[...] * inv_m - mean * mean
    scale = gamma_ref[...] * jax.lax.rsqrt(var + EPS)
    shift = beta_ref[...] - mean * scale
    y = conv_ref[...] * scale + shift
    o_ref[...] = jnp.maximum(y, 0.0).astype(o_ref.dtype)


def _choose_tile_m(m):
    # Largest lane-aligned tile that still exercises the software pipeline.
    for tm in (2048, 1024, 512, 256, 128):
        if m % tm == 0 and m // tm >= 2:
            return tm
    return m


def conv_block_bn(x_nchw, w_oihw, bias, gamma, beta):
    """Forward pass of ConvBlockBN. x_nchw: (N, Cin, H, W)."""
    N, Cin, H, W = x_nchw.shape
    Cout = w_oihw.shape[0]
    M = N * H * W
    K = 9 * Cin

    # --- wrapper-side layout plumbing (metadata / fused XLA ops, not in-kernel) ---
    x_nhwc = jnp.transpose(x_nchw, (0, 2, 3, 1))
    x_pad = jnp.pad(x_nhwc, ((0, 0), (1, 1), (1, 1), (0, 0)))          # padding=1
    taps = [x_pad[:, dy:dy + H, dx:dx + W, :] for dy in range(3) for dx in range(3)]
    patches = jnp.stack(taps, axis=3).reshape(M, K)                    # (M, 9*Cin)
    patches_t = patches.T.astype(jnp.float32)                          # (K, M)

    # OIHW -> (Cout, ky, kx, Cin) -> (Cout, K); matches the patch tap ordering.
    w_t = jnp.transpose(w_oihw, (0, 2, 3, 1)).reshape(Cout, K).astype(jnp.float32)

    # Conv bias dropped: training-mode BN subtracts the per-channel batch mean,
    # which cancels a constant per-channel bias exactly.
    del bias

    gamma2 = gamma.reshape(Cout, 1).astype(jnp.float32)
    beta2 = beta.reshape(Cout, 1).astype(jnp.float32)

    tm = _choose_tile_m(M)
    nt = M // tm

    conv_buf_bytes = Cout * M * 4
    pipeline_bytes = 2 * (K * tm + Cout * tm) * 4 + Cout * K * 4
    fused_ok = conv_buf_bytes + pipeline_bytes <= 24 * 1024 * 1024

    if fused_ok:
        # ---- single fused call: conv + stats (phase 0) then BN + ReLU (phase 1) ----
        out_t = pl.pallas_call(
            functools.partial(fused_conv_bn_relu_kernel, inv_m=1.0 / M, tm=tm),
            grid=(2, nt),
            in_specs=[
                pl.BlockSpec((Cout, K), lambda p, i: (0, 0)),            # weights
                # patches only needed in phase 0; park on the last block in phase 1
                pl.BlockSpec((K, tm), lambda p, i: (0, i * (1 - p) + (nt - 1) * p)),
                pl.BlockSpec((Cout, 1), lambda p, i: (0, 0)),            # gamma
                pl.BlockSpec((Cout, 1), lambda p, i: (0, 0)),            # beta
            ],
            # output only written in phase 1; parked on block 0 during phase 0
            out_specs=pl.BlockSpec((Cout, tm), lambda p, i: (0, i * p)),
            out_shape=jax.ShapeDtypeStruct((Cout, M), x_nchw.dtype),
            scratch_shapes=[
                pltpu.VMEM((Cout, M), jnp.float32),   # conv slab (stays in VMEM)
                pltpu.VMEM((Cout, 1), jnp.float32),   # sum
                pltpu.VMEM((Cout, 1), jnp.float32),   # sum of squares
                pltpu.VMEM((Cout, 1), jnp.float32),   # folded scale
                pltpu.VMEM((Cout, 1), jnp.float32),   # folded shift
            ],
            compiler_params=pltpu.CompilerParams(
                dimension_semantics=("arbitrary", "arbitrary"),
                vmem_limit_bytes=40 * 1024 * 1024,
            ),
        )(w_t, patches_t, gamma2, beta2)
    else:
        # ---- fallback: conv slab too big for VMEM -> two-call pipeline ----
        grid = (nt,)
        conv_t, csum, cssq = pl.pallas_call(
            conv_stats_kernel,
            grid=grid,
            in_specs=[
                pl.BlockSpec((Cout, K), lambda i: (0, 0)),
                pl.BlockSpec((K, tm), lambda i: (0, i)),
            ],
            out_specs=(
                pl.BlockSpec((Cout, tm), lambda i: (0, i)),
                pl.BlockSpec((Cout, 1), lambda i: (0, 0)),
                pl.BlockSpec((Cout, 1), lambda i: (0, 0)),
            ),
            out_shape=(
                jax.ShapeDtypeStruct((Cout, M), jnp.float32),
                jax.ShapeDtypeStruct((Cout, 1), jnp.float32),
                jax.ShapeDtypeStruct((Cout, 1), jnp.float32),
            ),
            compiler_params=pltpu.CompilerParams(
                dimension_semantics=("arbitrary",),
                vmem_limit_bytes=32 * 1024 * 1024,
            ),
        )(w_t, patches_t)

        out_t = pl.pallas_call(
            functools.partial(bn_relu_kernel, inv_m=1.0 / M),
            grid=grid,
            in_specs=[
                pl.BlockSpec((Cout, tm), lambda i: (0, i)),
                pl.BlockSpec((Cout, 1), lambda i: (0, 0)),
                pl.BlockSpec((Cout, 1), lambda i: (0, 0)),
                pl.BlockSpec((Cout, 1), lambda i: (0, 0)),
                pl.BlockSpec((Cout, 1), lambda i: (0, 0)),
            ],
            out_specs=pl.BlockSpec((Cout, tm), lambda i: (0, i)),
            out_shape=jax.ShapeDtypeStruct((Cout, M), x_nchw.dtype),
            compiler_params=pltpu.CompilerParams(
                dimension_semantics=("parallel",),
                vmem_limit_bytes=32 * 1024 * 1024,
            ),
        )(conv_t, csum, cssq, gamma2, beta2)

    # (Cout, N*H*W) -> (N, Cout, H, W): wrapper-side reshape/transpose only.
    return jnp.transpose(out_t.reshape(Cout, N, H, W), (1, 0, 2, 3))


def reference(x_nchw, w_oihw, bias, gamma, beta):
    """Plain-JAX reference (conv+bias + training-mode BN + ReLU)."""
    y = jax.lax.conv_general_dilated(
        x_nchw.astype(jnp.float32), w_oihw.astype(jnp.float32),
        window_strides=(1, 1), padding=((1, 1), (1, 1)),
        dimension_numbers=("NCHW", "OIHW", "NCHW"))
    y = y + bias[None, :, None, None]
    mean = jnp.mean(y, axis=(0, 2, 3), keepdims=True)
    var = jnp.mean((y - mean) ** 2, axis=(0, 2, 3), keepdims=True)
    y = (y - mean) * jax.lax.rsqrt(var + EPS)
    y = y * gamma[None, :, None, None] + beta[None, :, None, None]
    return jnp.maximum(y, 0.0)


if __name__ == "__main__":
    # Small shapes consistent with the module: batch=2, in_channels=4,
    # out_channels=8, spatial 16x16, kernel 3x3, stride 1, padding 1.
    N, Cin, Cout, H, W = 2, 4, 8, 16, 16

    key = jax.random.PRNGKey(0)
    kx, kw, kb, kg, kbeta = jax.random.split(key, 5)

    x = jax.random.normal(kx, (N, Cin, H, W), dtype=jnp.float32)
    w = jax.random.normal(kw, (Cout, Cin, 3, 3), dtype=jnp.float32) * 0.1
    b = jax.random.normal(kb, (Cout,), dtype=jnp.float32) * 0.1
    gamma = 1.0 + 0.1 * jax.random.normal(kg, (Cout,), dtype=jnp.float32)
    beta = 0.1 * jax.random.normal(kbeta, (Cout,), dtype=jnp.float32)

    out = jax.block_until_ready(conv_block_bn(x, w, b, gamma, beta))
    ref = jax.block_until_ready(reference(x, w, b, gamma, beta))

    assert out.shape == (N, Cout, H, W)
    assert jnp.allclose(out, ref, atol=1e-4, rtol=1e-4), "mismatch vs. reference"

    print("KERNEL_OK")
</pallas_src>

<mosaic_0001>
module attributes {stable_mosaic.version = 11 : i64} {
  func.func @fused_conv_bn_relu_kernel(%arg0: i32, %arg1: i32, %arg2: memref<8x36xf32, #tpu.memory_space<vmem>>, %arg3: memref<36x256xf32, #tpu.memory_space<vmem>>, %arg4: memref<8x1xf32, #tpu.memory_space<vmem>>, %arg5: memref<8x1xf32, #tpu.memory_space<vmem>>, %arg6: memref<8x256xf32, #tpu.memory_space<vmem>>, %arg7: memref<8x512xf32, #tpu.memory_space<vmem>>, %arg8: memref<8x1xf32, #tpu.memory_space<vmem>>, %arg9: memref<8x1xf32, #tpu.memory_space<vmem>>, %arg10: memref<8x1xf32, #tpu.memory_space<vmem>>, %arg11: memref<8x1xf32, #tpu.memory_space<vmem>>) attributes {dimension_semantics = [#tpu.dimension_semantics<arbitrary>, #tpu.dimension_semantics<arbitrary>], iteration_bounds = array<i64: 2, 2>, scalar_prefetch = 0 : i64, scratch_operands = 5 : i64, tpu.core_type = #tpu.core_type<tc>, window_params = [{pipeline_mode = #tpu.pipeline_mode<synchronous>, transform_indices = @transform_0, window_bounds = array<i64: 8, 36>}, {transform_indices = @transform_1, window_bounds = array<i64: 36, 256>}, {pipeline_mode = #tpu.pipeline_mode<synchronous>, transform_indices = @transform_2, window_bounds = array<i64: 8, 1>}, {pipeline_mode = #tpu.pipeline_mode<synchronous>, transform_indices = @transform_3, window_bounds = array<i64: 8, 1>}, {transform_indices = @transform_4, window_bounds = array<i64: 8, 256>}]} {
    %c256_i32 = arith.constant 256 : i32
    %0 = arith.muli %arg1, %c256_i32 : i32
    %1 = tpu.assume_multiple %0, 128 : i32
    %c0_i32 = arith.constant 0 : i32
    %2 = arith.cmpi eq, %arg0, %c0_i32 : i32
    %c0_i32_0 = arith.constant 0 : i32
    %3 = arith.cmpi eq, %arg1, %c0_i32_0 : i32
    %4 = arith.andi %2, %3 : i1
    %5 = arith.extui %4 : i1 to i32
    %c0_i32_1 = arith.constant 0 : i32
    %6 = arith.cmpi ne, %5, %c0_i32_1 : i32
    scf.if %6 {
      %cst = arith.constant 0.000000e+00 : f32
      %18 = vector.broadcast %cst : f32 to vector<8x1xf32>
      %c0 = arith.constant 0 : index
      %c0_8 = arith.constant 0 : index
      %19 = vector.load %arg8[%c0, %c0_8] : memref<8x1xf32, #tpu.memory_space<vmem>>, vector<8x1xf32>
      tpu.vector_store %arg8[%c0, %c0_8], %18 {strides = array<i32>} : memref<8x1xf32, #tpu.memory_space<vmem>>, vector<8x1xf32>,
      %cst_9 = arith.constant 0.000000e+00 : f32
      %20 = vector.broadcast %cst_9 : f32 to vector<8x1xf32>
      %c0_10 = arith.constant 0 : index
      %c0_11 = arith.constant 0 : index
      %21 = vector.load %arg9[%c0_10, %c0_11] : memref<8x1xf32, #tpu.memory_space<vmem>>, vector<8x1xf32>
      tpu.vector_store %arg9[%c0_10, %c0_11], %20 {strides = array<i32>} : memref<8x1xf32, #tpu.memory_space<vmem>>, vector<8x1xf32>,
    } else {
    }
    %c0_i32_2 = arith.constant 0 : i32
    %7 = arith.cmpi eq, %arg0, %c0_i32_2 : i32
    %8 = arith.extui %7 : i1 to i32
    %c0_i32_3 = arith.constant 0 : i32
    %9 = arith.cmpi ne, %8, %c0_i32_3 : i32
    scf.if %9 {
      %c0 = arith.constant 0 : index
      %c0_8 = arith.constant 0 : index
      %18 = vector.load %arg2[%c0, %c0_8] : memref<8x36xf32, #tpu.memory_space<vmem>>, vector<8x36xf32>
      %c0_9 = arith.constant 0 : index
      %c0_10 = arith.constant 0 : index
      %19 = vector.load %arg3[%c0_9, %c0_10] : memref<36x256xf32, #tpu.memory_space<vmem>>, vector<36x256xf32>
      %cst = arith.constant dense<0.000000e+00> : vector<8x256xf32>
      %20 = tpu.matmul %18, %19, %cst {dimension_numbers = #tpu.dot_dimension_numbers<[1], [0], [0], [1], [0, 0, 1, 1], [], []>} : vector<8x36xf32>, vector<36x256xf32>, vector<8x256xf32> -> vector<8x256xf32>
      %c0_11 = arith.constant 0 : index
      %21 = arith.index_cast %1 : i32 to index
      %22 = vector.load %arg7[%c0_11, %21] : memref<8x512xf32, #tpu.memory_space<vmem>>, vector<8x256xf32>
      tpu.vector_store %arg7[%c0_11, %21], %20 {strides = array<i32>} : memref<8x512xf32, #tpu.memory_space<vmem>>, vector<8x256xf32>,
      %c0_12 = arith.constant 0 : index
      %c0_13 = arith.constant 0 : index
      %23 = vector.load %arg8[%c0_12, %c0_13] : memref<8x1xf32, #tpu.memory_space<vmem>>, vector<8x1xf32>
      %cst_14 = arith.constant dense<0.000000e+00> : vector<8xf32>
      %24 = vector.multi_reduction <add>, %20, %cst_14 [1] : vector<8x256xf32> to vector<8xf32>
      %25 = vector.shape_cast %24 : vector<8xf32> to vector<8x1xf32>
      %26 = arith.addf %23, %25 : vector<8x1xf32>
      %c0_15 = arith.constant 0 : index
      %c0_16 = arith.constant 0 : index
      %27 = vector.load %arg8[%c0_15, %c0_16] : memref<8x1xf32, #tpu.memory_space<vmem>>, vector<8x1xf32>
      tpu.vector_store %arg8[%c0_15, %c0_16], %26 {strides = array<i32>} : memref<8x1xf32, #tpu.memory_space<vmem>>, vector<8x1xf32>,
      %c0_17 = arith.constant 0 : index
      %c0_18 = arith.constant 0 : index
      %28 = vector.load %arg9[%c0_17, %c0_18] : memref<8x1xf32, #tpu.memory_space<vmem>>, vector<8x1xf32>
      %29 = arith.mulf %20, %20 : vector<8x256xf32>
      %cst_19 = arith.constant dense<0.000000e+00> : vector<8xf32>
      %30 = vector.multi_reduction <add>, %29, %cst_19 [1] : vector<8x256xf32> to vector<8xf32>
      %31 = vector.shape_cast %30 : vector<8xf32> to vector<8x1xf32>
      %32 = arith.addf %28, %31 : vector<8x1xf32>
      %c0_20 = arith.constant 0 : index
      %c0_21 = arith.constant 0 : index
      %33 = vector.load %arg9[%c0_20, %c0_21] : memref<8x1xf32, #tpu.memory_space<vmem>>, vector<8x1xf32>
      tpu.vector_store %arg9[%c0_20, %c0_21], %32 {strides = array<i32>} : memref<8x1xf32, #tpu.memory_space<vmem>>, vector<8x1xf32>,
    } else {
    }
    %c1_i32 = arith.constant 1 : i32
    %10 = arith.cmpi eq, %arg0, %c1_i32 : i32
    %c0_i32_4 = arith.constant 0 : i32
    %11 = arith.cmpi eq, %arg1, %c0_i32_4 : i32
    %12 = arith.andi %10, %11 : i1
    %13 = arith.extui %12 : i1 to i32
    %c0_i32_5 = arith.constant 0 : i32
    %14 = arith.cmpi ne, %13, %c0_i32_5 : i32
    scf.if %14 {
      %c0 = arith.constant 0 : index
      %c0_8 = arith.constant 0 : index
      %18 = vector.load %arg8[%c0, %c0_8] : memref<8x1xf32, #tpu.memory_space<vmem>>, vector<8x1xf32>
      %cst = arith.constant 0.001953125 : f32
      %19 = vector.broadcast %cst : f32 to vector<8x1xf32>
      %20 = arith.mulf %18, %19 : vector<8x1xf32>
      %c0_9 = arith.constant 0 : index
      %c0_10 = arith.constant 0 : index
      %21 = vector.load %arg9[%c0_9, %c0_10] : memref<8x1xf32, #tpu.memory_space<vmem>>, vector<8x1xf32>
      %cst_11 = arith.constant 0.001953125 : f32
      %22 = vector.broadcast %cst_11 : f32 to vector<8x1xf32>
      %23 = arith.mulf %21, %22 : vector<8x1xf32>
      %24 = arith.mulf %20, %20 : vector<8x1xf32>
      %25 = arith.subf %23, %24 : vector<8x1xf32>
      %c0_12 = arith.constant 0 : index
      %c0_13 = arith.constant 0 : index
      %26 = vector.load %arg4[%c0_12, %c0_13] : memref<8x1xf32, #tpu.memory_space<vmem>>, vector<8x1xf32>
      %cst_14 = arith.constant 9.99999974E-6 : f32
      %27 = vector.broadcast %cst_14 : f32 to vector<8x1xf32>
      %28 = arith.addf %25, %27 : vector<8x1xf32>
      %29 = math.rsqrt %28 : vector<8x1xf32>
      %30 = arith.mulf %26, %29 : vector<8x1xf32>
      %c0_15 = arith.constant 0 : index
      %c0_16 = arith.constant 0 : index
      %31 = vector.load %arg10[%c0_15, %c0_16] : memref<8x1xf32, #tpu.memory_space<vmem>>, vector<8x1xf32>
      tpu.vector_store %arg10[%c0_15, %c0_16], %30 {strides = array<i32>} : memref<8x1xf32, #tpu.memory_space<vmem>>, vector<8x1xf32>,
      %c0_17 = arith.constant 0 : index
      %c0_18 = arith.constant 0 : index
      %32 = vector.load %arg5[%c0_17, %c0_18] : memref<8x1xf32, #tpu.memory_space<vmem>>, vector<8x1xf32>
      %33 = arith.mulf %20, %30 : vector<8x1xf32>
      %34 = arith.subf %32, %33 : vector<8x1xf32>
      %c0_19 = arith.constant 0 : index
      %c0_20 = arith.constant 0 : index
      %35 = vector.load %arg11[%c0_19, %c0_20] : memref<8x1xf32, #tpu.memory_space<vmem>>, vector<8x1xf32>
      tpu.vector_store %arg11[%c0_19, %c0_20], %34 {strides = array<i32>} : memref<8x1xf32, #tpu.memory_space<vmem>>, vector<8x1xf32>,
    } else {
    }
    %c1_i32_6 = arith.constant 1 : i32
    %15 = arith.cmpi eq, %arg0, %c1_i32_6 : i32
    %16 = arith.extui %15 : i1 to i32
    %c0_i32_7 = arith.constant 0 : i32
    %17 = arith.cmpi ne, %16, %c0_i32_7 : i32
    scf.if %17 {
      %c0 = arith.constant 0 : index
      %18 = arith.index_cast %1 : i32 to index
      %19 = vector.load %arg7[%c0, %18] : memref<8x512xf32, #tpu.memory_space<vmem>>, vector<8x256xf32>
      %c0_8 = arith.constant 0 : index
      %c0_9 = arith.constant 0 : index
      %20 = vector.load %arg10[%c0_8, %c0_9] : memref<8x1xf32, #tpu.memory_space<vmem>>, vector<8x1xf32>
      %21 = vector.broadcast %20 : vector<8x1xf32> to vector<8x256xf32>
      %22 = arith.mulf %19, %21 : vector<8x256xf32>
      %c0_10 = arith.constant 0 : index
      %c0_11 = arith.constant 0 : index
      %23 = vector.load %arg11[%c0_10, %c0_11] : memref<8x1xf32, #tpu.memory_space<vmem>>, vector<8x1xf32>
      %24 = vector.broadcast %23 : vector<8x1xf32> to vector<8x256xf32>
      %25 = arith.addf %22, %24 : vector<8x256xf32>
      %cst = arith.constant 0.000000e+00 : f32
      %26 = vector.broadcast %cst : f32 to vector<8x256xf32>
      %27 = arith.maximumf %25, %26 : vector<8x256xf32>
      %c0_12 = arith.constant 0 : index
      %c0_13 = arith.constant 0 : index
      %28 = vector.load %arg6[%c0_12, %c0_13] : memref<8x256xf32, #tpu.memory_space<vmem>>, vector<8x256xf32>
      tpu.vector_store %arg6[%c0_12, %c0_13], %27 {strides = array<i32>} : memref<8x256xf32, #tpu.memory_space<vmem>>, vector<8x256xf32>,
    } else {
    }
    return
  }
  func.func @transform_0(%arg0: i32, %arg1: i32) -> (i32, i32) {
    %c0_i32 = arith.constant 0 : i32
    %c0_i32_0 = arith.constant 0 : i32
    %c0_i32_1 = arith.constant 0 : i32
    return %c0_i32, %c0_i32_0 : i32, i32
  }
  func.func @transform_1(%arg0: i32, %arg1: i32) -> (i32, i32) {
    %c1_i32 = arith.constant 1 : i32
    %0 = arith.subi %c1_i32, %arg0 : i32
    %1 = arith.muli %arg1, %0 : i32
    %c1_i32_0 = arith.constant 1 : i32
    %2 = arith.muli %c1_i32_0, %arg0 : i32
    %3 = arith.addi %1, %2 : i32
    %c0_i32 = arith.constant 0 : i32
    %c0_i32_1 = arith.constant 0 : i32
    return %c0_i32, %3 : i32, i32
  }
  func.func @transform_2(%arg0: i32, %arg1: i32) -> (i32, i32) {
    %c0_i32 = arith.constant 0 : i32
    %c0_i32_0 = arith.constant 0 : i32
    %c0_i32_1 = arith.constant 0 : i32
    return %c0_i32, %c0_i32_0 : i32, i32
  }
  func.func @transform_3(%arg0: i32, %arg1: i32) -> (i32, i32) {
    %c0_i32 = arith.constant 0 : i32
    %c0_i32_0 = arith.constant 0 : i32
    %c0_i32_1 = arith.constant 0 : i32
    return %c0_i32, %c0_i32_0 : i32, i32
  }
  func.func @transform_4(%arg0: i32, %arg1: i32) -> (i32, i32) {
    %0 = arith.muli %arg1, %arg0 : i32
    %c0_i32 = arith.constant 0 : i32
    %c0_i32_0 = arith.constant 0 : i32
    return %c0_i32, %0 : i32, i32
  }
}

</mosaic_0001>

<llo_original>
// kernel: tpu_custom_call.1
$region0: #{tpu_custom_call.1}
  #allocation0 [shape = 'u32[]', space=smem, size = 0x4, offset = 0x4, fixed_abs, tag = 'smem constant byte address 0x4 - core index']
  #allocation1 [shape = 'u32[144,128]{1,0:T(1,128)}', space=vmem, size = 0x12000, scoped, tag = 'internal scratch']
  #allocation2 [shape = 'f32[8,512]{1,0:T(8,128)}', space=vmem, size = 0x4000, scoped, tag = 'scratch operand']
  #allocation3 [shape = 'f32[8,1]{1,0:T(8,128)}', space=vmem, size = 0x1000, scoped, tag = 'scratch operand']
  #allocation4 [shape = 'f32[8,1]{1,0:T(8,128)}', space=vmem, size = 0x1000, scoped, tag = 'scratch operand']
  #allocation5 [shape = 'f32[8,1]{1,0:T(8,128)}', space=vmem, size = 0x1000, scoped, tag = 'scratch operand']
  #allocation6 [shape = 'f32[8,1]{1,0:T(8,128)}', space=vmem, size = 0x1000, scoped, tag = 'scratch operand']
  %s0 = inlined_call_operand.vmem [shape: f32[8,36], index: 0, kind: input, shape index: {}]
  %s1 = inlined_call_operand.hbm [shape: f32[36,512], index: 1, kind: input, shape index: {}]
  %s2 = inlined_call_operand.vmem [shape: f32[8,1], index: 2, kind: input, shape index: {}]
  %s3 = inlined_call_operand.vmem [shape: f32[8,1], index: 3, kind: input, shape index: {}]
  %s4 = inlined_call_operand.hbm [shape: f32[8,512], index: 4, kind: output, shape index: {}]
  %s5 = sld [smem:[#allocation0]]
  $region69: #{tpu_custom_call.1} parent=0
    _
  %s7 = ssub.s32 1, %s5
  %s8 = scalar_select 0, %s7, %s5
  $region1: #{tpu_custom_call.1} parent=0
    #allocation7 [shape = 'u8[81920]{0}', space=vmem, size = 0x14000, scoped, tag = 'input window, operand 1']
    #allocation8 [shape = 's32[2]{0}', space=sflag, size = 0x8, scoped, tag = 'scoped memory for tpu_custom_call.1']
    #allocation9 [shape = 's32[2]{0}', space=sflag, size = 0x8, scoped, tag = 'scoped memory for tpu_custom_call.1']
    #allocation10 [shape = 'u8[16384]{0}', space=vmem, size = 0x4000, scoped, tag = 'output window, operand 0']
    %9 = vsyncpa [#allocation8], 0
    %s10 = scalar_lea.sflag [#allocation8], 1
    %11 = vsyncpa %s10, 0
    %12 = vsyncpa [#allocation9], 0
    %s13 = scalar_lea.sflag [#allocation9], 1
    %14 = vsyncpa %s13, 0
    loop: start=0, step=1, limit=6
    $region2: #{tpu_custom_call.1} parent=1 // loop_pre_header
      _
    $region3: #{tpu_custom_call.1} parent=1 // loop_header
      %s16 = sphi 0, %s20
      %p17 = scmp.ge.s32.totalorder %s16, 6
      %s23 = sphi 0, %s35
      %s24 = sphi 0, %s31
      %s25 = sphi 0, %s23
      %s26 = sphi 0, %s24
      %s27 = sphi 0, %s25
      %s28 = sphi 0, %s26
      %s36 = sphi 0, %s36
      %s38 = sphi 0, %s36
      %s39 = sphi 0, %s38
      %s53 = sphi 0, %s39
      %s65 = sphi 0, %s67
      %s68 = sphi 0, %s65
      %s69 = sphi 0, %s68
      %s85 = sphi 0, %s69
      %s89 = sphi 0, %s89
      %s91 = sphi 0, %s89
      %s92 = sphi 0, %s91
      %s106 = sphi 0, %s92
      %s110 = sphi 0, %s110
      %s112 = sphi 0, %s110
      %s113 = sphi 0, %s112
      %s127 = sphi 0, %s113
      %s135 = sphi 0, %s137
      %s138 = sphi 0, %s135
      %s139 = sphi 0, %s138
      %s155 = sphi 0, %s139
    $region4: #{tpu_custom_call.1} parent=1 // loop_header_branch
      %19 = sbr.rel (%p17) target = $region8
    $region5: #{tpu_custom_call.1} parent=1 // loop_body
      %s21 = ssub.s32 %s16, 1
      %s22 = ssub.s32 %s16, 2
      %s29 = sadd.s32 1, %s24
      %p30 = scmp.ge.s32.totalorder %s29, 2
      %s31 = scalar_select %p30, 0, %s29
      %s32 = sadd.s32 1, %s23
      %s33 = scalar_select %p30, %s32, %s23
      %p34 = scmp.ge.s32.totalorder %s33, 2
      %s35 = scalar_select %p34, 0, %s33
      %s37 = sadd.s32 %s36, 1
      %p40 = scmp.eq.s32.totalorder %s16, 3
      %p41 = scmp.ne.s32.totalorder %s36, %s38
      %p42 = scmp.eq.s32.totalorder %s16, 0
      %p43 = por %p41, %p42
      %p44 = scmp.ne.s32.totalorder %s36, %s38
      %p45 = scmp.eq.s32.totalorder %s21, 3
      %p46 = por %p44, %p45
      %p47 = scmp.ne.s32.totalorder %s38, %s39
      %p48 = scmp.eq.s32.totalorder %s21, 0
      %p49 = por %p47, %p48
      %p50 = scmp.ne.s32.totalorder %s38, %s39
      %p51 = scmp.eq.s32.totalorder %s22, 3
      %p52 = por %p50, %p51
      %p54 = scmp.ne.s32.totalorder %s39, %s53
      %p55 = scmp.eq.s32.totalorder %s22, 0
      %p56 = por %p54, %p55
      %s57 = ssub.s32 1, %s23
      %s58 = smul.u32 %s24, %s57
      %s59 = sadd.s32 %s58, %s23
      %s60 = ssub.s32 1, %s35
      %s61 = smul.u32 %s31, %s60
      %s62 = sadd.s32 %s61, %s35
      %s63 = ssub.s32 %s59, %s62
      %p64 = scmp.eq.s32.totalorder %s63, 0
      %s66 = sadd.s32 %s65, 1
      %s67 = scalar_select %p64, %s65, %s66
      %p70 = pneg %p64
      %p71 = scmp.eq.s32.totalorder %s16, 3
      %p72 = por %p70, %p71
      %p73 = scmp.ne.s32.totalorder %s65, %s68
      %p74 = scmp.eq.s32.totalorder %s16, 0
      %p75 = por %p73, %p74
      %p76 = scmp.ne.s32.totalorder %s65, %s68
      %p77 = scmp.eq.s32.totalorder %s21, 3
      %p78 = por %p76, %p77
      %p79 = scmp.ne.s32.totalorder %s68, %s69
      %p80 = scmp.eq.s32.totalorder %s21, 0
      %p81 = por %p79, %p80
      %p82 = scmp.ne.s32.totalorder %s68, %s69
      %p83 = scmp.eq.s32.totalorder %s22, 3
      %p84 = por %p82, %p83
      %p86 = scmp.ne.s32.totalorder %s69, %s85
      %p87 = scmp.eq.s32.totalorder %s22, 0
      %p88 = por %p86, %p87
      %s90 = sadd.s32 %s89, 1
      %p93 = scmp.eq.s32.totalorder %s16, 3
      %p94 = scmp.ne.s32.totalorder %s89, %s91
      %p95 = scmp.eq.s32.totalorder %s16, 0
      %p96 = por %p94, %p95
      %p97 = scmp.ne.s32.totalorder %s89, %s91
      %p98 = scmp.eq.s32.totalorder %s21, 3
      %p99 = por %p97, %p98
      %p100 = scmp.ne.s32.totalorder %s91, %s92
      %p101 = scmp.eq.s32.totalorder %s21, 0
      %p102 = por %p100, %p101
      %p103 = scmp.ne.s32.totalorder %s91, %s92
      %p104 = scmp.eq.s32.totalorder %s22, 3
      %p105 = por %p103, %p104
      %p107 = scmp.ne.s32.totalorder %s92, %s106
      %p108 = scmp.eq.s32.totalorder %s22, 0
      %p109 = por %p107, %p108
      %s111 = sadd.s32 %s110, 1
      %p114 = scmp.eq.s32.totalorder %s16, 3
      %p115 = scmp.ne.s32.totalorder %s110, %s112
      %p116 = scmp.eq.s32.totalorder %s16, 0
      %p117 = por %p115, %p116
      %p118 = scmp.ne.s32.totalorder %s110, %s112
      %p119 = scmp.eq.s32.totalorder %s21, 3
      %p120 = por %p118, %p119
      %p121 = scmp.ne.s32.totalorder %s112, %s113
      %p122 = scmp.eq.s32.totalorder %s21, 0
      %p123 = por %p121, %p122
      %p124 = scmp.ne.s32.totalorder %s112, %s113
      %p125 = scmp.eq.s32.totalorder %s22, 3
      %p126 = por %p124, %p125
      %p128 = scmp.ne.s32.totalorder %s113, %s127
      %p129 = scmp.eq.s32.totalorder %s22, 0
      %p130 = por %p128, %p129
      %s131 = smul.u32 %s24, %s23
      %s132 = smul.u32 %s31, %s35
      %s133 = ssub.s32 %s131, %s132
      %p134 = scmp.eq.s32.totalorder %s133, 0
      %s136 = sadd.s32 %s135, 1
      %s137 = scalar_select %p134, %s135, %s136
      %p140 = pneg %p134
      %p141 = scmp.eq.s32.totalorder %s16, 3
      %p142 = por %p140, %p141
      %p143 = scmp.ne.s32.totalorder %s135, %s138
      %p144 = scmp.eq.s32.totalorder %s16, 0
      %p145 = por %p143, %p144
      %p146 = scmp.ne.s32.totalorder %s135, %s138
      %p147 = scmp.eq.s32.totalorder %s21, 3
      %p148 = por %p146, %p147
      %p149 = scmp.ne.s32.totalorder %s138, %s139
      %p150 = scmp.eq.s32.totalorder %s21, 0
      %p151 = por %p149, %p150
      %p152 = scmp.ne.s32.totalorder %s138, %s139
      %p153 = scmp.eq.s32.totalorder %s22, 3
      %p154 = por %p152, %p153
      %p156 = scmp.ne.s32.totalorder %s139, %s155
      %p157 = scmp.eq.s32.totalorder %s22, 0
      %p158 = por %p156, %p157
      %p159 = scmp.le.s32.totalorder 1, %s16
      %p160 = scmp.lt.s32.totalorder %s16, 5
      %p161 = pnand %p159, %p160
      %p162 = pneg %p161
      // Predicated region
      $region9: #{tpu_custom_call.1} parent=5 // pred_check
        _
      $region10: #{tpu_custom_call.1} parent=5 // pred_check_branch
        %164 = sbr.rel (%p161) target = $region12
      $region11: #{tpu_custom_call.1} parent=5 // pred_region
        %s165 = ssub.s32 %s16, 1
        // Predicated region
        $region13: #{tpu_custom_call.1} parent=11 // pred_check
          %p166 = pneg %p49
        $region14: #{tpu_custom_call.1} parent=11 // pred_check_branch
          %168 = sbr.rel (%p166) target = $region16
        $region15: #{tpu_custom_call.1} parent=11 // pred_region
          _
        $region16: #{tpu_custom_call.1} parent=11 // pred_fallthru
          _
        // Predicated region
        $region17: #{tpu_custom_call.1} parent=11 // pred_check
          %p169 = pneg %p102
        $region18: #{tpu_custom_call.1} parent=11 // pred_check_branch
          %171 = sbr.rel (%p169) target = $region20
        $region19: #{tpu_custom_call.1} parent=11 // pred_region
          _
        $region20: #{tpu_custom_call.1} parent=11 // pred_fallthru
          _
        // Predicated region
        $region21: #{tpu_custom_call.1} parent=11 // pred_check
          %p172 = pneg %p123
        $region22: #{tpu_custom_call.1} parent=11 // pred_check_branch
          %174 = sbr.rel (%p172) target = $region24
        $region23: #{tpu_custom_call.1} parent=11 // pred_region
          _
        $region24: #{tpu_custom_call.1} parent=11 // pred_fallthru
          _
      $region12: #{tpu_custom_call.1} parent=5 // pred_fallthru
        _
      %p175 = scmp.lt.s32.totalorder %s16, 4
      // Predicated region
      $region25: #{tpu_custom_call.1} parent=5 // pred_check
        %p176 = pneg %p175
      $region26: #{tpu_custom_call.1} parent=5 // pred_check_branch
        %178 = sbr.rel (%p176) target = $region28
      $region27: #{tpu_custom_call.1} parent=5 // pred_region
        // Predicated region
        $region29: #{tpu_custom_call.1} parent=27 // pred_check
          %p179 = pneg %p75
        $region30: #{tpu_custom_call.1} parent=27 // pred_check_branch
          %181 = sbr.rel (%p179) target = $region32
        $region31: #{tpu_custom_call.1} parent=27 // pred_region
          %s182 = sand.u32 %s65, 1
          %s183 = scalar_lea.sflag [#allocation8], %s182
          %s184 = sand.u32 %s65, 1
          %s185 = smul.addr %s184, 80
          %s186 = scalar_lea.vmem [#allocation7], %s185
          %s187 = ssub.s32 1, %s23
          %s188 = smul.u32 %s24, %s187
          %s189 = sadd.s32 %s188, %s23
          %s190 = smul.u32 2, %s189
          %s192 = ssub.s32 1280, 1280
          %193 = vsyncadd %s183, %s192
          %s194 = smul.addr %s190, 128
          %s195 = scalar_lea.hbm %s1, %s194
          %s196 = sshll.u32 %s186, 4
          %s197 = int_to_ptr.vmem [resolvable:$true] %s196
          %202 = dma.hbm_to_vmem [thread:$0]  %s195, 1280, %s197, %s183, 512, 256, 16
        $region32: #{tpu_custom_call.1} parent=27 // pred_fallthru
          _
      $region28: #{tpu_custom_call.1} parent=5 // pred_fallthru
        _
      %p203 = scmp.le.s32.totalorder 1, %s16
      %p204 = scmp.lt.s32.totalorder %s16, 5
      %p205 = pnand %p203, %p204
      %p206 = pneg %p205
      // Predicated region
      $region33: #{tpu_custom_call.1} parent=5 // pred_check
        _
      $region34: #{tpu_custom_call.1} parent=5 // pred_check_branch
        %208 = sbr.rel (%p205) target = $region36
      $region35: #{tpu_custom_call.1} parent=5 // pred_region
        %s209 = ssub.s32 %s16, 1
        %s210 = sand.u32 %s68, 1
        %s211 = scalar_lea.sflag [#allocation8], %s210
        %s212 = sand.u32 %s68, 1
        %s213 = smul.addr %s212, 80
        %s214 = scalar_lea.vmem [#allocation7], %s213
        // Predicated region
        $region37: #{tpu_custom_call.1} parent=35 // pred_check
          %p215 = pneg %p81
        $region38: #{tpu_custom_call.1} parent=35 // pred_check_branch
          %217 = sbr.rel (%p215) target = $region40
        $region39: #{tpu_custom_call.1} parent=35 // pred_region
          %218 = dma.done %s211, 1280
        $region40: #{tpu_custom_call.1} parent=35 // pred_fallthru
          _
        %p219 = pneg %p49
        %p220 = pneg %p46
        %s221 = sand.u32 %s68, 1
        %s222 = scalar_lea.sflag [#allocation8], %s221
        %s223 = sand.u32 %s68, 1
        %s224 = smul.addr %s223, 80
        %s225 = scalar_lea.vmem [#allocation7], %s224
        %p226 = pneg %p81
        %p227 = pneg %p78
        %p228 = pneg %p102
        %p229 = pneg %p99
        %p230 = pneg %p123
        %p231 = pneg %p120
        %p232 = pneg %p151
        %p233 = pneg %p148
        %s234 = sand.u32 %s138, 1
        %s235 = scalar_lea.sflag [#allocation9], %s234
        %s236 = sand.u32 %s138, 1
        %s237 = smul.addr %s236, 16
        %s238 = scalar_lea.vmem [#allocation10], %s237
        %s239 = ssub.s32 1, %s25
        %s240 = smul.u32 %s26, %s239
        %s241 = sadd.s32 %s240, %s25
        %s242 = smul.u32 2, %s241
        %s243 = smul.u32 %s26, %s25
        %s244 = smul.u32 2, %s243
        %s245 = smul.u32 %s26, 256
        %p246 = scmp.eq.s32.totalorder %s25, 0
        %p247 = scmp.eq.s32.totalorder %s26, 0
        %p248 = pnand %p246, %p247
        %p249 = pneg %p248
        // Predicated region
        $region41: #{tpu_custom_call.1} parent=35 // pred_check
          _
        $region42: #{tpu_custom_call.1} parent=35 // pred_check_branch
          %251 = sbr.rel (%p248) target = $region44
        $region43: #{tpu_custom_call.1} parent=35 // pred_region
          %vm252 = vcmask 7168
          %253 = vst.msk [vmem:[#allocation3] sm:$0xff] %vm252, 0.0
          %254 = vst.msk [vmem:[#allocation4] sm:$0xff] %vm252, 0.0
        $region44: #{tpu_custom_call.1} parent=35 // pred_fallthru
          _
        // Predicated region
        $region45: #{tpu_custom_call.1} parent=35 // pred_check
          %p255 = pneg %p246
        $region46: #{tpu_custom_call.1} parent=35 // pred_check_branch
          %257 = sbr.rel (%p255) target = $region48
        $region47: #{tpu_custom_call.1} parent=35 // pred_region
          %v258 = vld [vmem:[%s0] sm:$0xff]
          %v259 = vld [vmem:[%s214] sm:$0xff]
          %v260 = vld [vmem:[%s214 + $0x8] sm:$0xff]
          %v261 = vld [vmem:[%s214 + $0x10] sm:$0xff]
          %v262 = vld [vmem:[%s214 + $0x18] sm:$0xff]
          %v263 = vld [vmem:[%s214 + $0x20] sm:$0xff]
          %v264 = vld [vmem:[%s214 + $0x28] sm:$0xff]
          %v265 = vld [vmem:[%s214 + $0x30] sm:$0xff]
          %v266 = vld [vmem:[%s214 + $0x38] sm:$0xff]
          %v267 = vld [vmem:[%s214 + $0x40] sm:$0xf]
          %v268 = vld [vmem:[%s214 + $0x48] sm:$0xf]
          %vm269 = vcmask 293888
          %v271 = vsel %vm269, %v258, 0
          %vm273 = vcmask 1043456
          %v275 = vsel %vm273, %v267, 0
          %v278 = vsel %vm273, %v268, 0
          %280 = vmatprep.subr.mxu0 0.0
          %281 = vmatpush1.msra.mxu0 0.0
          %282 = vmatprep.subr.mxu0 0.0
          %283 = vmatpush1.msra.mxu0 0.0
          %284 = vmatprep.subr.mxu0 0.0
          %285 = vmatpush1.msra.mxu0 0.0
          %286 = vmatprep.subr.mxu0 0.0
          %287 = vmatpush1.msra.mxu0 0.0
          %288 = vmatprep.subr.mxu0 0.0
          %289 = vmatpush1.msra.mxu0 0.0
          %290 = vmatprep.subr.mxu0 0.0
          %291 = vmatpush1.msra.mxu0 0.0
          %292 = vmatprep.subr.mxu0 0.0
          %293 = vmatpush1.msra.mxu0 0.0
          %294 = vmatprep.subr.mxu0 0.0
          %295 = vmatpush1.msra.mxu0 0.0
          %296 = vmatprep.subr.mxu0 0.0
          %297 = vmatpush1.msra.mxu0 0.0
          %298 = vmatprep.subr.mxu0 0.0
          %299 = vmatpush1.msra.mxu0 0.0
          %300 = vmatprep.subr.mxu0 0.0
          %301 = vmatpush1.msra.mxu0 0.0
          %302 = vmatprep.subr.mxu0 %v278
          %303 = vmatpush1.msra.mxu0 %v275
          %304 = vmatprep.subr.mxu0 %v266
          %305 = vmatpush1.msra.mxu0 %v265
          %306 = vmatprep.subr.mxu0 %v264
          %307 = vmatpush1.msra.mxu0 %v263
          %308 = vmatprep.subr.mxu0 %v262
          %309 = vmatpush1.msra.mxu0 %v261
          %310 = vmatprep.subr.mxu0 %v260
          %311 = vmatpush1.msra.mxu0 %v259
          %312 = vmatprep.subr.mxu0 0.0
          %313 = vmatpush2.msra.mxu0 0.0
          %314 = vmatprep.subr.mxu0 0.0
          %315 = vmatpush2.msra.mxu0 0.0
          %316 = vmatprep.subr.mxu0 0.0
          %317 = vmatpush2.msra.mxu0 0.0
          %318 = vmatprep.subr.mxu0 0.0
          %319 = vmatpush2.msra.mxu0 0.0
          %320 = vmatprep.subr.mxu0 0.0
          %321 = vmatpush2.msra.mxu0 0.0
          %322 = vmatprep.subr.mxu0 0.0
          %323 = vmatpush2.msra.mxu0 0.0
          %324 = vmatprep.subr.mxu0 0.0
          %325 = vmatpush2.msra.mxu0 0.0
          %326 = vmatprep.subr.mxu0 0.0
          %327 = vmatpush2.msra.mxu0 0.0
          %328 = vmatprep.subr.mxu0 0.0
          %329 = vmatpush2.msra.mxu0 0.0
          %330 = vmatprep.subr.mxu0 0.0
          %331 = vmatpush2.msra.mxu0 0.0
          %332 = vmatprep.subr.mxu0 0.0
          %333 = vmatpush2.msra.mxu0 0.0
          %334 = vmatprep.subr.mxu0 0.0
          %335 = vmatpush2.msra.mxu0 0.0
          %336 = vmatprep.subr.mxu0 0.0
          %337 = vmatpush2.msra.mxu0 0.0
          %338 = vmatprep.subr.mxu0 0.0
          %339 = vmatpush2.msra.mxu0 0.0
          %340 = vmatprep.subr.mxu0 0.0
          %341 = vmatpush2.msra.mxu0 0.0
          %342 = vmatprep.subr.mxu0 0.0
          %343 = vmatpush2.msra.mxu0 0.0
          %344 = vmatprep.mubr.f32.mxu0 0.0
          %345 = vmatmul.mubr.f32.gmra.mxu0 %v271
          %v346 = vpop.f32.mrf.mxu0
          %v347 = vadd.f32 0.0, %v346
          %v348 = vpop.f32.mrf.mxu0
          %v349 = vadd.f32 0.0, %v348
          %350 = vdwg.mxu0
          %s351 = sshra.s32 %s245, 7
          %s352 = sand.u32 %s245, 127
          %s353 = smul.addr %s351, 8
          %s354 = scalar_lea.vmem [#allocation2], %s353
          %355 = vst [vmem:[%s354] sm:$0xff] %v347
          %356 = vst [vmem:[%s354 + $0x8] sm:$0xff] %v349
          %v357 = vld [vmem:[#allocation3] sm:$0xff]
          %v358 = vadd.f32 %v347, %v349
          %359 = vadd.xlane.f32.xlu0 %v358
          %v360 = vpop.xlane.xlu0 %359
          %v361 = vadd.f32 %v357, %v360
          %vm362 = vcmask 7168
          %363 = vst.msk [vmem:[#allocation3] sm:$0xff] %vm362, %v361
          %v364 = vld [vmem:[#allocation4] sm:$0xff]
          %v365 = vmul.f32 %v347, %v347
          %v366 = vmul.f32 %v349, %v349
          %v367 = vadd.f32 %v365, %v366
          %368 = vadd.xlane.f32.xlu0 %v367
          %v369 = vpop.xlane.xlu0 %368
          %v370 = vadd.f32 %v364, %v369
          %371 = vst.msk [vmem:[#allocation4] sm:$0xff] %vm362, %v370
        $region48: #{tpu_custom_call.1} parent=35 // pred_fallthru
          _
        %p372 = scmp.eq.s32.totalorder %s25, 1
        %p373 = pnand %p372, %p247
        %p374 = pneg %p373
        // Predicated region
        $region49: #{tpu_custom_call.1} parent=35 // pred_check
          _
        $region50: #{tpu_custom_call.1} parent=35 // pred_check_branch
          %376 = sbr.rel (%p373) target = $region52
        $region51: #{tpu_custom_call.1} parent=35 // pred_region
          %v377 = vld [vmem:[#allocation3] sm:$0xff]
          %v378 = vmul.f32 %v377, 0.001953125
          %v379 = vld [vmem:[#allocation4] sm:$0xff]
          %v380 = vmul.f32 %v379, 0.001953125
          %v381 = vmul.f32 %v378, %v378
          %v382 = vsub.f32 %v380, %v381
          %v383 = vld [vmem:[%s2] sm:$0xff]
          %v384 = vadd.f32 %v382, 1e-05
          %v385 = vrsqrt.pop %v384
          %v386 = vmul.f32 %v383, %v385
          %vm387 = vcmask 7168
          %388 = vst.msk [vmem:[#allocation5] sm:$0xff] %vm387, %v386
          %v389 = vld [vmem:[%s3] sm:$0xff]
          %v390 = vmul.f32 %v378, %v386
          %v391 = vsub.f32 %v389, %v390
          %392 = vst.msk [vmem:[#allocation6] sm:$0xff] %vm387, %v391
        $region52: #{tpu_custom_call.1} parent=35 // pred_fallthru
          _
        // Predicated region
        $region53: #{tpu_custom_call.1} parent=35 // pred_check
          %p393 = pneg %p372
        $region54: #{tpu_custom_call.1} parent=35 // pred_check_branch
          %395 = sbr.rel (%p393) target = $region56
        $region55: #{tpu_custom_call.1} parent=35 // pred_region
          %s396 = sshra.s32 %s245, 7
          %s397 = sand.u32 %s245, 127
          %s398 = smul.addr %s396, 8
          %s399 = scalar_lea.vmem [#allocation2], %s398
          %v400 = vld [vmem:[%s399] sm:$0xff]
          %v401 = vld [vmem:[%s399 + $0x8] sm:$0xff]
          %v402 = vld [vmem:[#allocation5] sm:$0xff]
          %404 = vset.pattern.permute.xlu0 0
          %405 = vperm.xlu0 %404, %v402
          %v406 = vpop.permute.xlu0 %405
          %v408 = vmul.f32 %v400, %v406
          %v409 = vmul.f32 %v401, %v406
          %v410 = vld [vmem:[#allocation6] sm:$0xff]
          %412 = vset.pattern.permute.xlu0 0
          %413 = vperm.xlu0 %412, %v410
          %v414 = vpop.permute.xlu0 %413
          %v416 = vadd.f32 %v408, %v414
          %v417 = vadd.f32 %v409, %v414
          %v418 = vmax.f32 %v416, 0.0
          %v419 = vmax.f32 %v417, 0.0
          %420 = vst [vmem:[%s238] sm:$0xff] %v418
          %421 = vst [vmem:[%s238 + $0x8] sm:$0xff] %v419
        $region56: #{tpu_custom_call.1} parent=35 // pred_fallthru
          _
        %s422 = sand.u32 %s138, 1
        %s423 = scalar_lea.sflag [#allocation9], %s422
        %s424 = sand.u32 %s138, 1
        %s425 = smul.addr %s424, 16
        %s426 = scalar_lea.vmem [#allocation10], %s425
        // Predicated region
        $region57: #{tpu_custom_call.1} parent=35 // pred_check
          %p427 = pneg %p148
        $region58: #{tpu_custom_call.1} parent=35 // pred_check_branch
          %429 = sbr.rel (%p427) target = $region60
        $region59: #{tpu_custom_call.1} parent=35 // pred_region
          %s430 = smul.u32 %s26, %s25
          %s431 = smul.u32 2, %s430
          %s433 = ssub.s32 256, 256
          %434 = vsyncadd %s423, %s433
          %s435 = smul.addr %s431, 128
          %s436 = scalar_lea.hbm %s4, %s435
          %s438 = sshll.u32 %s426, 4
          %s439 = int_to_ptr.vmem [resolvable:$true] %s438
          %441 = dma.vmem_to_hbm [thread:$0]  %s439, 256, %s436, %s423
        $region60: #{tpu_custom_call.1} parent=35 // pred_fallthru
          _
      $region36: #{tpu_custom_call.1} parent=5 // pred_fallthru
        _
      %p442 = scmp.le.s32.totalorder 2, %s16
      // Predicated region
      $region61: #{tpu_custom_call.1} parent=5 // pred_check
        %p443 = pneg %p442
      $region62: #{tpu_custom_call.1} parent=5 // pred_check_branch
        %445 = sbr.rel (%p443) target = $region64
      $region63: #{tpu_custom_call.1} parent=5 // pred_region
        %s446 = ssub.s32 %s16, 2
        // Predicated region
        $region65: #{tpu_custom_call.1} parent=63 // pred_check
          %p447 = pneg %p154
        $region66: #{tpu_custom_call.1} parent=63 // pred_check_branch
          %449 = sbr.rel (%p447) target = $region68
        $region67: #{tpu_custom_call.1} parent=63 // pred_region
          %s450 = sand.u32 %s139, 1
          %s451 = scalar_lea.sflag [#allocation9], %s450
          %s452 = sand.u32 %s139, 1
          %s453 = smul.addr %s452, 16
          %s454 = scalar_lea.vmem [#allocation10], %s453
          %455 = dma.done %s451, 256
        $region68: #{tpu_custom_call.1} parent=63 // pred_fallthru
          _
      $region64: #{tpu_custom_call.1} parent=5 // pred_fallthru
        _
    $region6: #{tpu_custom_call.1} parent=1 // loop_footer
      %s20 = sadd.s32 1, %s16
    $region7: #{tpu_custom_call.1} parent=1 // loop_footer_branch
      %15 = sbr.rel target = $region3
    $region8: #{tpu_custom_call.1} parent=1 // loop_exit
      _
    %456 = vsyncpa [#allocation8], 1
    %s457 = scalar_lea.sflag [#allocation8], 1
    %458 = vsyncpa %s457, 1
    %459 = vsyncpa [#allocation9], 1
    %s460 = scalar_lea.sflag [#allocation9], 1
    %461 = vsyncpa %s460, 1

</llo_original>
